<compile_context>
chip_gen: v7x
topology: tpu7x:2x2x1
jax: 0.10.0
libtpu: 0.0.40
codegen_flags: <defaults>
</compile_context>

<pallas_src>
import functools
import math

import jax
import jax.numpy as jnp
import numpy as np
from jax.experimental import pallas as pl
from jax.experimental.pallas import tpu as pltpu

NEG_INF = -1e9                      # matches torch masked_fill value exactly
_VMEM_LIMIT = 64 * 1024 * 1024


def _round_up(x, m):
    return ((x + m - 1) // m) * m


# ---------------------------------------------------------------------------
# Row-tiled linear kernel: y = x @ W + b
# ---------------------------------------------------------------------------
def _linear_kernel(x_ref, w_ref, b_ref, o_ref):
    # MXU operands in the weight dtype (bf16 by default), f32 accumulation.
    x = x_ref[...].astype(w_ref.dtype)
    acc = jnp.dot(x, w_ref[...], preferred_element_type=jnp.float32)
    o_ref[...] = (acc + b_ref[...]).astype(o_ref.dtype)


def linear(x, w, b, *, compute_dtype=jnp.bfloat16, out_dtype=None, block_rows=256):
    """x: (..., d_in); w: (d_in, d_out); b: (d_out,)."""
    if out_dtype is None:
        out_dtype = x.dtype
    d_in = x.shape[-1]
    d_out = w.shape[-1]
    lead = x.shape[:-1]

    x2 = x.reshape(-1, d_in)
    rows = x2.shape[0]
    bm = min(block_rows, _round_up(rows, 8))
    rows_p = _round_up(rows, bm)
    if rows_p != rows:
        x2 = jnp.pad(x2, ((0, rows_p - rows), (0, 0)))

    # Cast weights to the MXU dtype once in the wrapper (halves weight DMA / VMEM);
    # bias stays f32 and is added post-accumulation.
    w_c = w.astype(compute_dtype)
    b_c = b.reshape(1, d_out).astype(jnp.float32)

    # TODO(synk): single-buffer the constant-index w/b blocks (pipeline_mode=pl.Buffered(1))
    # to reclaim half the weight VMEM on v7x when d_model is large.
    out = pl.pallas_call(
        _linear_kernel,
        out_shape=jax.ShapeDtypeStruct((rows_p, d_out), out_dtype),
        grid=(rows_p // bm,),
        in_specs=[
            pl.BlockSpec((bm, d_in), lambda i: (i, 0)),
            pl.BlockSpec((d_in, d_out), lambda i: (0, 0)),
            pl.BlockSpec((1, d_out), lambda i: (0, 0)),
        ],
        out_specs=pl.BlockSpec((bm, d_out), lambda i: (i, 0)),
        compiler_params=pltpu.CompilerParams(
            dimension_semantics=("parallel",),
            vmem_limit_bytes=_VMEM_LIMIT),
    )(x2, w_c, b_c)

    if rows_p != rows:
        out = out[:rows]
    return out.reshape(*lead, d_out)


# ---------------------------------------------------------------------------
# Flash-style multi-head attention kernel.
# Grid: (batch, q_tiles, kv_tiles) with kv innermost ('arbitrary').
# ---------------------------------------------------------------------------
def _flash_mha_kernel(q_ref, k_ref, v_ref, bias_ref, o_ref,
                      m_scr, l_scr, acc_scr, *, h, d_k):
    ki = pl.program_id(2)

    @pl.when(ki == 0)
    def _init():
        m_scr[...] = jnp.full_like(m_scr, -jnp.inf)
        l_scr[...] = jnp.zeros_like(l_scr)
        acc_scr[...] = jnp.zeros_like(acc_scr)

    q = q_ref[0]        # (tq, d_model), already scaled by 1/sqrt(d_k)
    k = k_ref[0]        # (tk, d_model)
    v = v_ref[0]        # (tk, d_model)
    bias = bias_ref[0]  # (tq, tk) f32 additive mask: 0 keep / NEG_INF drop

    # Heads handled by lane-slicing d_model -> no (seq, h, d_k) transposes at all.
    # TODO(synk): for small d_k (< MXU tile) zero-pad d_k / pack heads to fill the MXU.
    for head in range(h):
        lo, hi = head * d_k, (head + 1) * d_k
        qh = q[:, lo:hi]                              # (tq, d_k)
        kh = k[:, lo:hi]                              # (tk, d_k)
        vh = v[:, lo:hi]                              # (tk, d_k)

        # Scores in f32 (bf16 operands on the MXU, f32 accumulate); single bias add.
        s = jax.lax.dot_general(
            qh, kh, dimension_numbers=(((1,), (1,)), ((), ())),
            preferred_element_type=jnp.float32) + bias   # (tq, tk)

        m_prev = m_scr[head]                          # (tq, 1)
        l_prev = l_scr[head]                          # (tq, 1)
        m_new = jnp.maximum(m_prev, jnp.max(s, axis=-1, keepdims=True))
        alpha = jnp.exp(m_prev - m_new)               # (tq, 1)
        p = jnp.exp(s - m_new)                        # (tq, tk) f32
        l_scr[head] = alpha * l_prev + jnp.sum(p, axis=-1, keepdims=True)
        acc_scr[head] = alpha * acc_scr[head] + jnp.dot(
            p.astype(vh.dtype), vh, preferred_element_type=jnp.float32)
        m_scr[head] = m_new

    @pl.when(ki == pl.num_programs(2) - 1)
    def _finalize():
        inv_l = pl.reciprocal(l_scr[...], approx=True)   # EUP slot, ~free
        ctx = jnp.concatenate(
            [acc_scr[head] * inv_l[head] for head in range(h)], axis=-1)
        o_ref[0] = ctx.astype(o_ref.dtype)               # (tq, d_model), lane-dense store


def flash_attention(q, k, v, bias, *, h, block_q=128, block_kv=128):
    """q: (B, q_len, d_model) pre-scaled by 1/sqrt(d_k); k, v: (B, s_len, d_model);
    bias: (B, q_len, s_len) f32 additive mask."""
    B, q_len, d_model = q.shape
    s_len = k.shape[1]
    assert d_model % h == 0
    d_k = d_model // h
    assert block_q % 8 == 0
    assert block_kv % 128 == 0

    blk_q = block_q if q_len >= block_q else _round_up(q_len, 8)
    blk_k = block_kv if s_len >= block_kv else _round_up(s_len, 8)
    q_len_p = _round_up(q_len, blk_q)
    s_len_p = _round_up(s_len, blk_k)

    if q_len_p != q_len:
        pad = q_len_p - q_len
        q = jnp.pad(q, ((0, 0), (0, pad), (0, 0)))
        bias = jnp.pad(bias, ((0, 0), (0, pad), (0, 0)))
    if s_len_p != s_len:
        pad = s_len_p - s_len
        k = jnp.pad(k, ((0, 0), (0, pad), (0, 0)))
        v = jnp.pad(v, ((0, 0), (0, pad), (0, 0)))
        bias = jnp.pad(bias, ((0, 0), (0, 0), (0, pad)), constant_values=NEG_INF)

    grid = (B, q_len_p // blk_q, s_len_p // blk_k)

    out = pl.pallas_call(
        functools.partial(_flash_mha_kernel, h=h, d_k=d_k),
        out_shape=jax.ShapeDtypeStruct((B, q_len_p, d_model), q.dtype),
        grid=grid,
        in_specs=[
            pl.BlockSpec((1, blk_q, d_model), lambda b, qi, ki: (b, qi, 0)),
            pl.BlockSpec((1, blk_k, d_model), lambda b, qi, ki: (b, ki, 0)),
            pl.BlockSpec((1, blk_k, d_model), lambda b, qi, ki: (b, ki, 0)),
            pl.BlockSpec((1, blk_q, blk_k), lambda b, qi, ki: (b, qi, ki)),
        ],
        out_specs=pl.BlockSpec((1, blk_q, d_model), lambda b, qi, ki: (b, qi, 0)),
        scratch_shapes=[
            pltpu.VMEM((h, blk_q, 1), jnp.float32),     # running max m
            pltpu.VMEM((h, blk_q, 1), jnp.float32),     # running denom l
            pltpu.VMEM((h, blk_q, d_k), jnp.float32),   # unnormalized output acc
        ],
        compiler_params=pltpu.CompilerParams(
            dimension_semantics=("parallel", "parallel", "arbitrary"),
            vmem_limit_bytes=_VMEM_LIMIT),
    )(q, k, v, bias)

    if q_len_p != q_len:
        out = out[:, :q_len]
    return out


# ---------------------------------------------------------------------------
# Full MultiHeadedAttention forward.
# ---------------------------------------------------------------------------
def multi_headed_attention(query, key, value, mask, params, *, h,
                           compute_dtype=jnp.bfloat16,
                           block_q=128, block_kv=128):
    """query: (B, q_len, d_model); key/value: (B, s_len, d_model);
    mask: (B, q_len, s_len) (0 == masked). Dropout == eval (identity)."""
    B, q_len, d_model = query.shape
    assert d_model % h == 0
    d_k = d_model // h
    wq, bq, wk, bk, wv, bv, wo, bo = params

    # Fold 1/sqrt(d_k) into the Q projection (one-time param transform, not a score scale).
    scale = 1.0 / math.sqrt(d_k)
    q_p = linear(query, wq * scale, bq * scale,
                 compute_dtype=compute_dtype, out_dtype=compute_dtype)
    k_p = linear(key, wk, bk, compute_dtype=compute_dtype, out_dtype=compute_dtype)
    v_p = linear(value, wv, bv, compute_dtype=compute_dtype, out_dtype=compute_dtype)

    # Additive mask bias, precomputed once in f32 (the ==0 compare stays in the mask dtype).
    bias = jnp.where(mask == 0, jnp.float32(NEG_INF), jnp.float32(0.0))

    # TODO(synk): nn.Dropout(p=0.1) on the attention probabilities is skipped
    # (inference/eval semantics); p_attn (self.attn) is never materialized (flash-style).
    ctx = flash_attention(q_p, k_p, v_p, bias, h=h,
                          block_q=block_q, block_kv=block_kv)

    return linear(ctx, wo, bo, compute_dtype=compute_dtype, out_dtype=query.dtype)


# ---------------------------------------------------------------------------
# Pure-JAX reference mirroring the PyTorch forward (dropout in eval mode).
# ---------------------------------------------------------------------------
def mha_reference(query, key, value, mask, params, *, h):
    B, q_len, d_model = query.shape
    d_k = d_model // h
    wq, bq, wk, bk, wv, bv, wo, bo = params

    def proj(x, w, b):
        y = x @ w + b
        return y.reshape(B, -1, h, d_k).transpose(0, 2, 1, 3)   # (B, h, seq, d_k)

    q = proj(query, wq, bq)
    k = proj(key, wk, bk)
    v = proj(value, wv, bv)

    scores = jnp.einsum('bhqd,bhkd->bhqk', q, k) / math.sqrt(d_k)
    scores = jnp.where(mask[:, None, :, :] == 0, NEG_INF, scores)
    p = jax.nn.softmax(scores, axis=-1)
    ctx = jnp.einsum('bhqk,bhkd->bhqd', p, v)
    ctx = ctx.transpose(0, 2, 1, 3).reshape(B, q_len, d_model)
    return ctx @ wo + bo


if __name__ == "__main__":
    # Small but non-degenerate shapes: 2 kv tiles and 2 q tiles per batch element so the
    # online-softmax accumulation across the 'arbitrary' kv grid axis is exercised.
    B, q_len, s_len = 2, 256, 256
    h, d_model = 4, 128                 # d_k = 32; d_model is a multiple of 128 (lane-dense)

    key0 = jax.random.PRNGKey(0)
    keys = jax.random.split(key0, 12)

    bound = 1.0 / math.sqrt(d_model)
    def w_init(k):
        return jax.random.uniform(k, (d_model, d_model), jnp.float32, -bound, bound)
    def b_init(k):
        return jax.random.uniform(k, (d_model,), jnp.float32, -bound, bound)

    params = (w_init(keys[0]), b_init(keys[1]),
              w_init(keys[2]), b_init(keys[3]),
              w_init(keys[4]), b_init(keys[5]),
              w_init(keys[6]), b_init(keys[7]))

    query = jax.random.normal(keys[8], (B, q_len, d_model), jnp.float32)
    key_x = jax.random.normal(keys[9], (B, s_len, d_model), jnp.float32)
    value = jax.random.normal(keys[10], (B, s_len, d_model), jnp.float32)

    # Mask with some zeros, but every query row keeps at least one visible key.
    rand_mask = (jax.random.uniform(keys[11], (B, q_len, s_len)) > 0.3)
    mask = rand_mask.at[:, :, 0].set(True).astype(jnp.float32)

    # f32 compute path (validates tiling / online softmax / masking logic tightly).
    out_f32 = multi_headed_attention(query, key_x, value, mask, params, h=h,
                                     compute_dtype=jnp.float32)
    out_f32 = jax.block_until_ready(out_f32)

    # bf16 MXU path (default, the fast configuration).
    out_bf16 = multi_headed_attention(query, key_x, value, mask, params, h=h,
                                      compute_dtype=jnp.bfloat16)
    out_bf16 = jax.block_until_ready(out_bf16)

    ref = mha_reference(query, key_x, value, mask, params, h=h)

    np.testing.assert_allclose(np.asarray(out_f32), np.asarray(ref),
                               rtol=5e-3, atol=5e-3)
    np.testing.assert_allclose(np.asarray(out_bf16), np.asarray(ref),
                               rtol=2e-2, atol=2e-2)

    print("KERNEL_OK")
</pallas_src>

<mosaic_0001>
module attributes {stable_mosaic.version = 11 : i64} {
  func.func @_linear_kernel(%arg0: i32, %arg1: memref<256x128xf32, #tpu.memory_space<vmem>>, %arg2: memref<128x128xf32, #tpu.memory_space<vmem>>, %arg3: memref<1x128xf32, #tpu.memory_space<vmem>>, %arg4: memref<256x128xf32, #tpu.memory_space<vmem>>) attributes {dimension_semantics = [#tpu.dimension_semantics<parallel>], iteration_bounds = array<i64: 2>, scalar_prefetch = 0 : i64, scratch_operands = 0 : i64, tpu.core_type = #tpu.core_type<tc>, window_params = [{transform_indices = @transform_0, window_bounds = array<i64: 256, 128>}, {pipeline_mode = #tpu.pipeline_mode<synchronous>, transform_indices = @transform_1, window_bounds = array<i64: 128, 128>}, {pipeline_mode = #tpu.pipeline_mode<synchronous>, transform_indices = @transform_2, window_bounds = array<i64: 1, 128>}, {transform_indices = @transform_3, window_bounds = array<i64: 256, 128>}]} {
    %c0 = arith.constant 0 : index
    %c0_0 = arith.constant 0 : index
    %0 = vector.load %arg1[%c0, %c0_0] : memref<256x128xf32, #tpu.memory_space<vmem>>, vector<256x128xf32>
    %c0_1 = arith.constant 0 : index
    %c0_2 = arith.constant 0 : index
    %1 = vector.load %arg2[%c0_1, %c0_2] : memref<128x128xf32, #tpu.memory_space<vmem>>, vector<128x128xf32>
    %cst = arith.constant dense<0.000000e+00> : vector<256x128xf32>
    %2 = tpu.matmul %0, %1, %cst {dimension_numbers = #tpu.dot_dimension_numbers<[1], [0], [0], [1], [0, 0, 1, 1], [], []>} : vector<256x128xf32>, vector<128x128xf32>, vector<256x128xf32> -> vector<256x128xf32>
    %c0_3 = arith.constant 0 : index
    %c0_4 = arith.constant 0 : index
    %3 = vector.load %arg3[%c0_3, %c0_4] : memref<1x128xf32, #tpu.memory_space<vmem>>, vector<1x128xf32>
    %4 = vector.broadcast %3 : vector<1x128xf32> to vector<256x128xf32>
    %5 = arith.addf %2, %4 : vector<256x128xf32>
    %c0_5 = arith.constant 0 : index
    %c0_6 = arith.constant 0 : index
    %6 = vector.load %arg4[%c0_5, %c0_6] : memref<256x128xf32, #tpu.memory_space<vmem>>, vector<256x128xf32>
    tpu.vector_store %arg4[%c0_5, %c0_6], %5 {strides = array<i32>} : memref<256x128xf32, #tpu.memory_space<vmem>>, vector<256x128xf32>,
    return
  }
  func.func @transform_0(%arg0: i32) -> (i32, i32) {
    %c0_i32 = arith.constant 0 : i32
    %c0_i32_0 = arith.constant 0 : i32
    return %arg0, %c0_i32 : i32, i32
  }
  func.func @transform_1(%arg0: i32) -> (i32, i32) {
    %c0_i32 = arith.constant 0 : i32
    %c0_i32_0 = arith.constant 0 : i32
    %c0_i32_1 = arith.constant 0 : i32
    return %c0_i32, %c0_i32_0 : i32, i32
  }
  func.func @transform_2(%arg0: i32) -> (i32, i32) {
    %c0_i32 = arith.constant 0 : i32
    %c0_i32_0 = arith.constant 0 : i32
    %c0_i32_1 = arith.constant 0 : i32
    return %c0_i32, %c0_i32_0 : i32, i32
  }
  func.func @transform_3(%arg0: i32) -> (i32, i32) {
    %c0_i32 = arith.constant 0 : i32
    %c0_i32_0 = arith.constant 0 : i32
    return %arg0, %c0_i32 : i32, i32
  }
}

</mosaic_0001>

<llo_original>
// kernel: tpu_custom_call.1
$region0: #{tpu_custom_call.1}
  #allocation0 [shape = 'u32[]', space=smem, size = 0x4, offset = 0x4, fixed_abs, tag = 'smem constant byte address 0x4 - core index']
  #allocation1 [shape = 'u32[144,128]{1,0:T(1,128)}', space=vmem, size = 0x12000, scoped, tag = 'internal scratch']
  %s0 = inlined_call_operand.hbm [shape: f32[512,128], index: 0, kind: input, shape index: {}]
  %s1 = inlined_call_operand.hbm [shape: f32[128,128], index: 1, kind: input, shape index: {}]
  %s2 = inlined_call_operand.hbm [shape: f32[1,128], index: 2, kind: input, shape index: {}]
  %s3 = inlined_call_operand.hbm [shape: f32[512,128], index: 3, kind: output, shape index: {}]
  %s4 = sld [smem:[#allocation0]]
  $region57: #{tpu_custom_call.1} parent=0
    _
  %s6 = ssub.s32 1, %s4
  %s7 = scalar_select 0, %s6, %s4
  $region1: #{tpu_custom_call.1} parent=0
    #allocation2 [shape = 'u8[262144]{0}', space=vmem, size = 0x40000, scoped, tag = 'input window, operand 0']
    #allocation3 [shape = 's32[2]{0}', space=sflag, size = 0x8, scoped, tag = 'scoped memory for tpu_custom_call.1']
    #allocation4 [shape = 's32[2]{0}', space=sflag, size = 0x8, scoped, tag = 'scoped memory for tpu_custom_call.1']
    #allocation5 [shape = 'u8[65536]{0}', space=vmem, size = 0x10000, scoped, tag = 'input window, operand 1, single buffered']
    #allocation6 [shape = 's32[1]{0}', space=sflag, size = 0x4, scoped, tag = 'scoped memory for tpu_custom_call.1']
    #allocation7 [shape = 'u8[512]{0}', space=vmem, size = 0x400, scoped, tag = 'input window, operand 2, single buffered']
    #allocation8 [shape = 'u8[262144]{0}', space=vmem, size = 0x40000, scoped, tag = 'output window, operand 0']
    %8 = vsyncpa [#allocation3], 0
    %s9 = scalar_lea.sflag [#allocation3], 1
    %10 = vsyncpa %s9, 0
    %11 = vsyncpa [#allocation6], 0
    %12 = vsyncpa [#allocation4], 0
    %s13 = scalar_lea.sflag [#allocation4], 1
    %14 = vsyncpa %s13, 0
    loop: start=0, step=1, limit=4
    $region2: #{tpu_custom_call.1} parent=1 // loop_pre_header
      _
    $region3: #{tpu_custom_call.1} parent=1 // loop_header
      %s16 = sphi 0, %s20
      %p17 = scmp.ge.s32.totalorder %s16, 4
      %s26 = sphi 0, %s28
      %s29 = sphi 0, %s26
      %s30 = sphi 0, %s29
      %s46 = sphi 0, %s30
      %s50 = sphi 0, %s50
      %s52 = sphi 0, %s50
      %s53 = sphi 0, %s52
      %s67 = sphi 0, %s53
      %s71 = sphi 0, %s71
      %s73 = sphi 0, %s71
      %s74 = sphi 0, %s73
      %s88 = sphi 0, %s74
      %s94 = sphi 0, %s96
      %s97 = sphi 0, %s94
      %s98 = sphi 0, %s97
      %s114 = sphi 0, %s98
    $region4: #{tpu_custom_call.1} parent=1 // loop_header_branch
      %19 = sbr.rel (%p17) target = $region8
    $region5: #{tpu_custom_call.1} parent=1 // loop_body
      %s21 = ssub.s32 %s16, 1
      %s22 = ssub.s32 %s16, 2
      %s23 = sadd.s32 %s16, 1
      %s24 = ssub.s32 %s16, %s23
      %p25 = scmp.eq.s32.totalorder %s24, 0
      %s27 = sadd.s32 %s26, 1
      %s28 = scalar_select %p25, %s26, %s27
      %p31 = pneg %p25
      %p32 = scmp.eq.s32.totalorder %s16, 1
      %p33 = por %p31, %p32
      %p34 = scmp.ne.s32.totalorder %s26, %s29
      %p35 = scmp.eq.s32.totalorder %s16, 0
      %p36 = por %p34, %p35
      %p37 = scmp.ne.s32.totalorder %s26, %s29
      %p38 = scmp.eq.s32.totalorder %s21, 1
      %p39 = por %p37, %p38
      %p40 = scmp.ne.s32.totalorder %s29, %s30
      %p41 = scmp.eq.s32.totalorder %s21, 0
      %p42 = por %p40, %p41
      %p43 = scmp.ne.s32.totalorder %s29, %s30
      %p44 = scmp.eq.s32.totalorder %s22, 1
      %p45 = por %p43, %p44
      %p47 = scmp.ne.s32.totalorder %s30, %s46
      %p48 = scmp.eq.s32.totalorder %s22, 0
      %p49 = por %p47, %p48
      %s51 = sadd.s32 %s50, 1
      %p54 = scmp.eq.s32.totalorder %s16, 1
      %p55 = scmp.ne.s32.totalorder %s50, %s52
      %p56 = scmp.eq.s32.totalorder %s16, 0
      %p57 = por %p55, %p56
      %p58 = scmp.ne.s32.totalorder %s50, %s52
      %p59 = scmp.eq.s32.totalorder %s21, 1
      %p60 = por %p58, %p59
      %p61 = scmp.ne.s32.totalorder %s52, %s53
      %p62 = scmp.eq.s32.totalorder %s21, 0
      %p63 = por %p61, %p62
      %p64 = scmp.ne.s32.totalorder %s52, %s53
      %p65 = scmp.eq.s32.totalorder %s22, 1
      %p66 = por %p64, %p65
      %p68 = scmp.ne.s32.totalorder %s53, %s67
      %p69 = scmp.eq.s32.totalorder %s22, 0
      %p70 = por %p68, %p69
      %s72 = sadd.s32 %s71, 1
      %p75 = scmp.eq.s32.totalorder %s16, 1
      %p76 = scmp.ne.s32.totalorder %s71, %s73
      %p77 = scmp.eq.s32.totalorder %s16, 0
      %p78 = por %p76, %p77
      %p79 = scmp.ne.s32.totalorder %s71, %s73
      %p80 = scmp.eq.s32.totalorder %s21, 1
      %p81 = por %p79, %p80
      %p82 = scmp.ne.s32.totalorder %s73, %s74
      %p83 = scmp.eq.s32.totalorder %s21, 0
      %p84 = por %p82, %p83
      %p85 = scmp.ne.s32.totalorder %s73, %s74
      %p86 = scmp.eq.s32.totalorder %s22, 1
      %p87 = por %p85, %p86
      %p89 = scmp.ne.s32.totalorder %s74, %s88
      %p90 = scmp.eq.s32.totalorder %s22, 0
      %p91 = por %p89, %p90
      %s92 = ssub.s32 %s16, %s23
      %p93 = scmp.eq.s32.totalorder %s92, 0
      %s95 = sadd.s32 %s94, 1
      %s96 = scalar_select %p93, %s94, %s95
      %p99 = pneg %p93
      %p100 = scmp.eq.s32.totalorder %s16, 1
      %p101 = por %p99, %p100
      %p102 = scmp.ne.s32.totalorder %s94, %s97
      %p103 = scmp.eq.s32.totalorder %s16, 0
      %p104 = por %p102, %p103
      %p105 = scmp.ne.s32.totalorder %s94, %s97
      %p106 = scmp.eq.s32.totalorder %s21, 1
      %p107 = por %p105, %p106
      %p108 = scmp.ne.s32.totalorder %s97, %s98
      %p109 = scmp.eq.s32.totalorder %s21, 0
      %p110 = por %p108, %p109
      %p111 = scmp.ne.s32.totalorder %s97, %s98
      %p112 = scmp.eq.s32.totalorder %s22, 1
      %p113 = por %p111, %p112
      %p115 = scmp.ne.s32.totalorder %s98, %s114
      %p116 = scmp.eq.s32.totalorder %s22, 0
      %p117 = por %p115, %p116
      %p118 = scmp.le.s32.totalorder 1, %s16
      %p119 = scmp.lt.s32.totalorder %s16, 3
      %p120 = pnand %p118, %p119
      %p121 = pneg %p120
      // Predicated region
      $region9: #{tpu_custom_call.1} parent=5 // pred_check
        _
      $region10: #{tpu_custom_call.1} parent=5 // pred_check_branch
        %123 = sbr.rel (%p120) target = $region12
      $region11: #{tpu_custom_call.1} parent=5 // pred_region
        %s124 = ssub.s32 %s16, 1
        // Predicated region
        $region13: #{tpu_custom_call.1} parent=11 // pred_check
          %p125 = pneg %p63
        $region14: #{tpu_custom_call.1} parent=11 // pred_check_branch
          %127 = sbr.rel (%p125) target = $region16
        $region15: #{tpu_custom_call.1} parent=11 // pred_region
          %s129 = ssub.s32 2048, 2048
          %130 = vsyncadd [#allocation6], %s129
          %s131 = sshll.u32 [#allocation5], 4
          %s132 = int_to_ptr.vmem [resolvable:$true] %s131
          %137 = dma.hbm_to_vmem [thread:$0]  %s1, 2048, %s132, [#allocation6], 128, 128, 8
        $region16: #{tpu_custom_call.1} parent=11 // pred_fallthru
          _
        // Predicated region
        $region17: #{tpu_custom_call.1} parent=11 // pred_check
          %p138 = pneg %p84
        $region18: #{tpu_custom_call.1} parent=11 // pred_check_branch
          %140 = sbr.rel (%p138) target = $region20
        $region19: #{tpu_custom_call.1} parent=11 // pred_region
          %s142 = ssub.s32 16, 16
          %143 = vsyncadd [#allocation6], %s142
          %s145 = sshll.u32 [#allocation7], 4
          %s146 = int_to_ptr.vmem [resolvable:$true] %s145
          %148 = dma.hbm_to_vmem [thread:$0]  %s2, 16, %s146, [#allocation6]
        $region20: #{tpu_custom_call.1} parent=11 // pred_fallthru
          _
      $region12: #{tpu_custom_call.1} parent=5 // pred_fallthru
        _
      %p149 = scmp.lt.s32.totalorder %s16, 2
      // Predicated region
      $region21: #{tpu_custom_call.1} parent=5 // pred_check
        %p150 = pneg %p149
      $region22: #{tpu_custom_call.1} parent=5 // pred_check_branch
        %152 = sbr.rel (%p150) target = $region24
      $region23: #{tpu_custom_call.1} parent=5 // pred_region
        // Predicated region
        $region25: #{tpu_custom_call.1} parent=23 // pred_check
          %p153 = pneg %p36
        $region26: #{tpu_custom_call.1} parent=23 // pred_check_branch
          %155 = sbr.rel (%p153) target = $region28
        $region27: #{tpu_custom_call.1} parent=23 // pred_region
          %s156 = sand.u32 %s26, 1
          %s157 = scalar_lea.sflag [#allocation3], %s156
          %s158 = sand.u32 %s26, 1
          %s159 = smul.addr %s158, 256
          %s160 = scalar_lea.vmem [#allocation2], %s159
          %s161 = smul.u32 32, %s16
          %s163 = ssub.s32 4096, 4096
          %164 = vsyncadd %s157, %s163
          %s165 = smul.addr %s161, 128
          %s166 = scalar_lea.hbm %s0, %s165
          %s167 = sshll.u32 %s160, 4
          %s168 = int_to_ptr.vmem [resolvable:$true] %s167
          %173 = dma.hbm_to_vmem [thread:$0]  %s166, 4096, %s168, %s157, 128, 128, 8
        $region28: #{tpu_custom_call.1} parent=23 // pred_fallthru
          _
      $region24: #{tpu_custom_call.1} parent=5 // pred_fallthru
        _
      %p174 = scmp.le.s32.totalorder 1, %s16
      %p175 = scmp.lt.s32.totalorder %s16, 3
      %p176 = pnand %p174, %p175
      %p177 = pneg %p176
      // Predicated region
      $region29: #{tpu_custom_call.1} parent=5 // pred_check
        _
      $region30: #{tpu_custom_call.1} parent=5 // pred_check_branch
        %179 = sbr.rel (%p176) target = $region32
      $region31: #{tpu_custom_call.1} parent=5 // pred_region
        %s180 = ssub.s32 %s16, 1
        %s181 = sand.u32 %s29, 1
        %s182 = scalar_lea.sflag [#allocation3], %s181
        %s183 = sand.u32 %s29, 1
        %s184 = smul.addr %s183, 256
        %s185 = scalar_lea.vmem [#allocation2], %s184
        // Predicated region
        $region33: #{tpu_custom_call.1} parent=31 // pred_check
          %p186 = pneg %p42
        $region34: #{tpu_custom_call.1} parent=31 // pred_check_branch
          %188 = sbr.rel (%p186) target = $region36
        $region35: #{tpu_custom_call.1} parent=31 // pred_region
          %189 = dma.done %s182, 4096
        $region36: #{tpu_custom_call.1} parent=31 // pred_fallthru
          _
        // Predicated region
        $region37: #{tpu_custom_call.1} parent=31 // pred_check
          %p190 = pneg %p63
        $region38: #{tpu_custom_call.1} parent=31 // pred_check_branch
          %192 = sbr.rel (%p190) target = $region40
        $region39: #{tpu_custom_call.1} parent=31 // pred_region
          %193 = dma.done [#allocation6], 2048
        $region40: #{tpu_custom_call.1} parent=31 // pred_fallthru
          _
        // Predicated region
        $region41: #{tpu_custom_call.1} parent=31 // pred_check
          %p194 = pneg %p84
        $region42: #{tpu_custom_call.1} parent=31 // pred_check_branch
          %196 = sbr.rel (%p194) target = $region44
        $region43: #{tpu_custom_call.1} parent=31 // pred_region
          %197 = dma.done [#allocation6], 16
        $region44: #{tpu_custom_call.1} parent=31 // pred_fallthru
          _
        %s198 = sand.u32 %s29, 1
        %s199 = scalar_lea.sflag [#allocation3], %s198
        %s200 = sand.u32 %s29, 1
        %s201 = smul.addr %s200, 256
        %s202 = scalar_lea.vmem [#allocation2], %s201
        %p203 = pneg %p42
        %p204 = pneg %p39
        %p205 = pneg %p63
        %p206 = pneg %p60
        %p207 = pneg %p84
        %p208 = pneg %p81
        %p209 = pneg %p110
        %p210 = pneg %p107
        %s211 = sand.u32 %s97, 1
        %s212 = scalar_lea.sflag [#allocation4], %s211
        %s213 = sand.u32 %s97, 1
        %s214 = smul.addr %s213, 256
        %s215 = scalar_lea.vmem [#allocation8], %s214
        %s216 = smul.u32 32, %s21
        %s217 = smul.u32 32, %s21
        %v218 = vld [vmem:[%s185] sm:$0xff]
        %v219 = vld [vmem:[%s185 + $0x8] sm:$0xff]
        %v220 = vld [vmem:[%s185 + $0x10] sm:$0xff]
        %v221 = vld [vmem:[%s185 + $0x18] sm:$0xff]
        %v222 = vld [vmem:[%s185 + $0x20] sm:$0xff]
        %v223 = vld [vmem:[%s185 + $0x28] sm:$0xff]
        %v224 = vld [vmem:[%s185 + $0x30] sm:$0xff]
        %v225 = vld [vmem:[%s185 + $0x38] sm:$0xff]
        %v226 = vld [vmem:[%s185 + $0x40] sm:$0xff]
        %v227 = vld [vmem:[%s185 + $0x48] sm:$0xff]
        %v228 = vld [vmem:[%s185 + $0x50] sm:$0xff]
        %v229 = vld [vmem:[%s185 + $0x58] sm:$0xff]
        %v230 = vld [vmem:[%s185 + $0x60] sm:$0xff]
        %v231 = vld [vmem:[%s185 + $0x68] sm:$0xff]
        %v232 = vld [vmem:[%s185 + $0x70] sm:$0xff]
        %v233 = vld [vmem:[%s185 + $0x78] sm:$0xff]
        %v234 = vld [vmem:[%s185 + $0x80] sm:$0xff]
        %v235 = vld [vmem:[%s185 + $0x88] sm:$0xff]
        %v236 = vld [vmem:[%s185 + $0x90] sm:$0xff]
        %v237 = vld [vmem:[%s185 + $0x98] sm:$0xff]
        %v238 = vld [vmem:[%s185 + $0xa0] sm:$0xff]
        %v239 = vld [vmem:[%s185 + $0xa8] sm:$0xff]
        %v240 = vld [vmem:[%s185 + $0xb0] sm:$0xff]
        %v241 = vld [vmem:[%s185 + $0xb8] sm:$0xff]
        %v242 = vld [vmem:[%s185 + $0xc0] sm:$0xff]
        %v243 = vld [vmem:[%s185 + $0xc8] sm:$0xff]
        %v244 = vld [vmem:[%s185 + $0xd0] sm:$0xff]
        %v245 = vld [vmem:[%s185 + $0xd8] sm:$0xff]
        %v246 = vld [vmem:[%s185 + $0xe0] sm:$0xff]
        %v247 = vld [vmem:[%s185 + $0xe8] sm:$0xff]
        %v248 = vld [vmem:[%s185 + $0xf0] sm:$0xff]
        %v249 = vld [vmem:[%s185 + $0xf8] sm:$0xff]
        %v250 = vld [vmem:[#allocation5] sm:$0xff]
        %v251 = vld [vmem:[#allocation5 + $0x8] sm:$0xff]
        %v252 = vld [vmem:[#allocation5 + $0x10] sm:$0xff]
        %v253 = vld [vmem:[#allocation5 + $0x18] sm:$0xff]
        %v254 = vld [vmem:[#allocation5 + $0x20] sm:$0xff]
        %v255 = vld [vmem:[#allocation5 + $0x28] sm:$0xff]
        %v256 = vld [vmem:[#allocation5 + $0x30] sm:$0xff]
        %v257 = vld [vmem:[#allocation5 + $0x38] sm:$0xff]
        %v258 = vld [vmem:[#allocation5 + $0x40] sm:$0xff]
        %v259 = vld [vmem:[#allocation5 + $0x48] sm:$0xff]
        %v260 = vld [vmem:[#allocation5 + $0x50] sm:$0xff]
        %v261 = vld [vmem:[#allocation5 + $0x58] sm:$0xff]
        %v262 = vld [vmem:[#allocation5 + $0x60] sm:$0xff]
        %v263 = vld [vmem:[#allocation5 + $0x68] sm:$0xff]
        %v264 = vld [vmem:[#allocation5 + $0x70] sm:$0xff]
        %v265 = vld [vmem:[#allocation5 + $0x78] sm:$0xff]
        %v266 = vld [vmem:[#allocation7] sm:$0x1]
        %v268 = vlaneseq
        %v269 = vshrl.u32 %v268, 7
        %v270 = vsub.s32 0, %v269
        %v271 = vrot.slane %v266, %v270
        %273 = vmatprep.subr.mxu0 0.0
        %274 = vmatpush1.msra.mxu0 %v250
        %275 = vmatprep.subr.mxu0 0.0
        %276 = vmatpush1.msra.mxu0 %v251
        %277 = vmatprep.subr.mxu0 0.0
        %278 = vmatpush1.msra.mxu0 %v252
        %279 = vmatprep.subr.mxu0 0.0
        %280 = vmatpush1.msra.mxu0 %v253
        %281 = vmatprep.subr.mxu0 0.0
        %282 = vmatpush1.msra.mxu0 %v254
        %283 = vmatprep.subr.mxu0 0.0
        %284 = vmatpush1.msra.mxu0 %v255
        %285 = vmatprep.subr.mxu0 0.0
        %286 = vmatpush1.msra.mxu0 %v256
        %287 = vmatprep.subr.mxu0 0.0
        %288 = vmatpush1.msra.mxu0 %v257
        %289 = vmatprep.subr.mxu0 0.0
        %290 = vmatpush1.msra.mxu0 %v258
        %291 = vmatprep.subr.mxu0 0.0
        %292 = vmatpush1.msra.mxu0 %v259
        %293 = vmatprep.subr.mxu0 0.0
        %294 = vmatpush1.msra.mxu0 %v260
        %295 = vmatprep.subr.mxu0 0.0
        %296 = vmatpush1.msra.mxu0 %v261
        %297 = vmatprep.subr.mxu0 0.0
        %298 = vmatpush1.msra.mxu0 %v262
        %299 = vmatprep.subr.mxu0 0.0
        %300 = vmatpush1.msra.mxu0 %v263
        %301 = vmatprep.subr.mxu0 0.0
        %302 = vmatpush1.msra.mxu0 %v264
        %303 = vmatprep.subr.mxu0 0.0
        %304 = vmatpush1.msra.mxu0 %v265
        %305 = vmatprep.subr.mxu0 0.0
        %306 = vmatpush1.msra.mxu0 0.0
        %307 = vmatprep.subr.mxu0 0.0
        %308 = vmatpush1.msra.mxu0 0.0
        %309 = vmatprep.subr.mxu0 0.0
        %310 = vmatpush1.msra.mxu0 0.0
        %311 = vmatprep.subr.mxu0 0.0
        %312 = vmatpush1.msra.mxu0 0.0
        %313 = vmatprep.subr.mxu0 0.0
        %314 = vmatpush1.msra.mxu0 0.0
        %315 = vmatprep.subr.mxu0 0.0
        %316 = vmatpush1.msra.mxu0 0.0
        %317 = vmatprep.subr.mxu0 0.0
        %318 = vmatpush1.msra.mxu0 0.0
        %319 = vmatprep.subr.mxu0 0.0
        %320 = vmatpush1.msra.mxu0 0.0
        %321 = vmatprep.subr.mxu0 0.0
        %322 = vmatpush1.msra.mxu0 0.0
        %323 = vmatprep.subr.mxu0 0.0
        %324 = vmatpush1.msra.mxu0 0.0
        %325 = vmatprep.subr.mxu0 0.0
        %326 = vmatpush1.msra.mxu0 0.0
        %327 = vmatprep.subr.mxu0 0.0
        %328 = vmatpush1.msra.mxu0 0.0
        %329 = vmatprep.subr.mxu0 0.0
        %330 = vmatpush1.msra.mxu0 0.0
        %331 = vmatprep.subr.mxu0 0.0
        %332 = vmatpush1.msra.mxu0 0.0
        %333 = vmatprep.subr.mxu0 0.0
        %334 = vmatpush1.msra.mxu0 0.0
        %335 = vmatprep.subr.mxu0 0.0
        %336 = vmatpush1.msra.mxu0 0.0
        %337 = vmatprep.mubr.f32.mxu0 0.0
        %338 = vmatmul.mubr.f32.gmra.mrb[0].mxu0 %v218
        %v339 = vpop.f32.mrb[0].mxu0
        %v340 = vadd.f32 %v271, %v339
        %v341 = vpop.f32.mrb[0].mxu0
        %342 = vmatprep.mubr.f32.mxu0 0.0
        %343 = vmatmul.mubr.f32.gmra.mrb[0].mxu0 %v219
        %v344 = vpop.f32.mrb[0].mxu0
        %v345 = vadd.f32 %v271, %v344
        %v346 = vpop.f32.mrb[0].mxu0
        %347 = vmatprep.mubr.f32.mxu0 0.0
        %348 = vmatmul.mubr.f32.gmra.mrb[0].mxu0 %v220
        %v349 = vpop.f32.mrb[0].mxu0
        %v350 = vadd.f32 %v271, %v349
        %v351 = vpop.f32.mrb[0].mxu0
        %352 = vmatprep.mubr.f32.mxu0 0.0
        %353 = vmatmul.mubr.f32.gmra.mrb[0].mxu0 %v221
        %v354 = vpop.f32.mrb[0].mxu0
        %v355 = vadd.f32 %v271, %v354
        %v356 = vpop.f32.mrb[0].mxu0
        %357 = vmatprep.mubr.f32.mxu0 0.0
        %358 = vmatmul.mubr.f32.gmra.mrb[0].mxu0 %v222
        %v359 = vpop.f32.mrb[0].mxu0
        %v360 = vadd.f32 %v271, %v359
        %v361 = vpop.f32.mrb[0].mxu0
        %362 = vmatprep.mubr.f32.mxu0 0.0
        %363 = vmatmul.mubr.f32.gmra.mrb[0].mxu0 %v223
        %v364 = vpop.f32.mrb[0].mxu0
        %v365 = vadd.f32 %v271, %v364
        %v366 = vpop.f32.mrb[0].mxu0
        %367 = vmatprep.mubr.f32.mxu0 0.0
        %368 = vmatmul.mubr.f32.gmra.mrb[0].mxu0 %v224
        %v369 = vpop.f32.mrb[0].mxu0
        %v370 = vadd.f32 %v271, %v369
        %v371 = vpop.f32.mrb[0].mxu0
        %372 = vmatprep.mubr.f32.mxu0 0.0
        %373 = vmatmul.mubr.f32.gmra.mrb[0].mxu0 %v225
        %v374 = vpop.f32.mrb[0].mxu0
        %v375 = vadd.f32 %v271, %v374
        %v376 = vpop.f32.mrb[0].mxu0
        %377 = vmatprep.mubr.f32.mxu0 0.0
        %378 = vmatmul.mubr.f32.gmra.mrb[0].mxu0 %v226
        %v379 = vpop.f32.mrb[0].mxu0
        %v380 = vadd.f32 %v271, %v379
        %v381 = vpop.f32.mrb[0].mxu0
        %382 = vmatprep.mubr.f32.mxu0 0.0
        %383 = vmatmul.mubr.f32.gmra.mrb[0].mxu0 %v227
        %v384 = vpop.f32.mrb[0].mxu0
        %v385 = vadd.f32 %v271, %v384
        %v386 = vpop.f32.mrb[0].mxu0
        %387 = vmatprep.mubr.f32.mxu0 0.0
        %388 = vmatmul.mubr.f32.gmra.mrb[0].mxu0 %v228
        %v389 = vpop.f32.mrb[0].mxu0
        %v390 = vadd.f32 %v271, %v389
        %v391 = vpop.f32.mrb[0].mxu0
        %392 = vmatprep.mubr.f32.mxu0 0.0
        %393 = vmatmul.mubr.f32.gmra.mrb[0].mxu0 %v229
        %v394 = vpop.f32.mrb[0].mxu0
        %v395 = vadd.f32 %v271, %v394
        %v396 = vpop.f32.mrb[0].mxu0
        %397 = vmatprep.mubr.f32.mxu0 0.0
        %398 = vmatmul.mubr.f32.gmra.mrb[0].mxu0 %v230
        %v399 = vpop.f32.mrb[0].mxu0
        %v400 = vadd.f32 %v271, %v399
        %v401 = vpop.f32.mrb[0].mxu0
        %402 = vmatprep.mubr.f32.mxu0 0.0
        %403 = vmatmul.mubr.f32.gmra.mrb[0].mxu0 %v231
        %v404 = vpop.f32.mrb[0].mxu0
        %v405 = vadd.f32 %v271, %v404
        %v406 = vpop.f32.mrb[0].mxu0
        %407 = vmatprep.mubr.f32.mxu0 0.0
        %408 = vmatmul.mubr.f32.gmra.mrb[0].mxu0 %v232
        %v409 = vpop.f32.mrb[0].mxu0
        %v410 = vadd.f32 %v271, %v409
        %v411 = vpop.f32.mrb[0].mxu0
        %412 = vmatprep.mubr.f32.mxu0 0.0
        %413 = vmatmul.mubr.f32.gmra.mrb[0].mxu0 %v233
        %v414 = vpop.f32.mrb[0].mxu0
        %v415 = vadd.f32 %v271, %v414
        %v416 = vpop.f32.mrb[0].mxu0
        %417 = vmatprep.mubr.f32.mxu0 0.0
        %418 = vmatmul.mubr.f32.gmra.mrb[0].mxu0 %v234
        %v419 = vpop.f32.mrb[0].mxu0
        %v420 = vadd.f32 %v271, %v419
        %v421 = vpop.f32.mrb[0].mxu0
        %422 = vmatprep.mubr.f32.mxu0 0.0
        %423 = vmatmul.mubr.f32.gmra.mrb[0].mxu0 %v235
        %v424 = vpop.f32.mrb[0].mxu0
        %v425 = vadd.f32 %v271, %v424
        %v426 = vpop.f32.mrb[0].mxu0
        %427 = vmatprep.mubr.f32.mxu0 0.0
        %428 = vmatmul.mubr.f32.gmra.mrb[0].mxu0 %v236
        %v429 = vpop.f32.mrb[0].mxu0
        %v430 = vadd.f32 %v271, %v429
        %v431 = vpop.f32.mrb[0].mxu0
        %432 = vmatprep.mubr.f32.mxu0 0.0
        %433 = vmatmul.mubr.f32.gmra.mrb[0].mxu0 %v237
        %v434 = vpop.f32.mrb[0].mxu0
        %v435 = vadd.f32 %v271, %v434
        %v436 = vpop.f32.mrb[0].mxu0
        %437 = vmatprep.mubr.f32.mxu0 0.0
        %438 = vmatmul.mubr.f32.gmra.mrb[0].mxu0 %v238
        %v439 = vpop.f32.mrb[0].mxu0
        %v440 = vadd.f32 %v271, %v439
        %v441 = vpop.f32.mrb[0].mxu0
        %442 = vmatprep.mubr.f32.mxu0 0.0
        %443 = vmatmul.mubr.f32.gmra.mrb[0].mxu0 %v239
        %v444 = vpop.f32.mrb[0].mxu0
        %v445 = vadd.f32 %v271, %v444
        %v446 = vpop.f32.mrb[0].mxu0
        %447 = vmatprep.mubr.f32.mxu0 0.0
        %448 = vmatmul.mubr.f32.gmra.mrb[0].mxu0 %v240
        %v449 = vpop.f32.mrb[0].mxu0
        %v450 = vadd.f32 %v271, %v449
        %v451 = vpop.f32.mrb[0].mxu0
        %452 = vmatprep.mubr.f32.mxu0 0.0
        %453 = vmatmul.mubr.f32.gmra.mrb[0].mxu0 %v241
        %v454 = vpop.f32.mrb[0].mxu0
        %v455 = vadd.f32 %v271, %v454
        %v456 = vpop.f32.mrb[0].mxu0
        %457 = vmatprep.mubr.f32.mxu0 0.0
        %458 = vmatmul.mubr.f32.gmra.mrb[0].mxu0 %v242
        %v459 = vpop.f32.mrb[0].mxu0
        %v460 = vadd.f32 %v271, %v459
        %v461 = vpop.f32.mrb[0].mxu0
        %462 = vmatprep.mubr.f32.mxu0 0.0
        %463 = vmatmul.mubr.f32.gmra.mrb[0].mxu0 %v243
        %v464 = vpop.f32.mrb[0].mxu0
        %v465 = vadd.f32 %v271, %v464
        %v466 = vpop.f32.mrb[0].mxu0
        %467 = vmatprep.mubr.f32.mxu0 0.0
        %468 = vmatmul.mubr.f32.gmra.mrb[0].mxu0 %v244
        %v469 = vpop.f32.mrb[0].mxu0
        %v470 = vadd.f32 %v271, %v469
        %v471 = vpop.f32.mrb[0].mxu0
        %472 = vmatprep.mubr.f32.mxu0 0.0
        %473 = vmatmul.mubr.f32.gmra.mrb[0].mxu0 %v245
        %v474 = vpop.f32.mrb[0].mxu0
        %v475 = vadd.f32 %v271, %v474
        %v476 = vpop.f32.mrb[0].mxu0
        %477 = vmatprep.mubr.f32.mxu0 0.0
        %478 = vmatmul.mubr.f32.gmra.mrb[0].mxu0 %v246
        %v479 = vpop.f32.mrb[0].mxu0
        %v480 = vadd.f32 %v271, %v479
        %v481 = vpop.f32.mrb[0].mxu0
        %482 = vmatprep.mubr.f32.mxu0 0.0
        %483 = vmatmul.mubr.f32.gmra.mrb[0].mxu0 %v247
        %v484 = vpop.f32.mrb[0].mxu0
        %v485 = vadd.f32 %v271, %v484
        %v486 = vpop.f32.mrb[0].mxu0
        %487 = vmatprep.mubr.f32.mxu0 0.0
        %488 = vmatmul.mubr.f32.gmra.mrb[0].mxu0 %v248
        %v489 = vpop.f32.mrb[0].mxu0
        %v490 = vadd.f32 %v271, %v489
        %v491 = vpop.f32.mrb[0].mxu0
        %492 = vmatprep.mubr.f32.mxu0 0.0
        %493 = vmatmul.mubr.f32.gmra.mrb[0].mxu0 %v249
        %v494 = vpop.f32.mrb[0].mxu0
        %v495 = vadd.f32 %v271, %v494
        %v496 = vpop.f32.mrb[0].mxu0
        %497 = vdwg.mxu0
        %498 = vst [vmem:[%s215] sm:$0xff] %v340
        %499 = vst [vmem:[%s215 + $0x8] sm:$0xff] %v345
        %500 = vst [vmem:[%s215 + $0x10] sm:$0xff] %v350
        %501 = vst [vmem:[%s215 + $0x18] sm:$0xff] %v355
        %502 = vst [vmem:[%s215 + $0x20] sm:$0xff] %v360
        %503 = vst [vmem:[%s215 + $0x28] sm:$0xff] %v365
        %504 = vst [vmem:[%s215 + $0x30] sm:$0xff] %v370
        %505 = vst [vmem:[%s215 + $0x38] sm:$0xff] %v375
        %506 = vst [vmem:[%s215 + $0x40] sm:$0xff] %v380
        %507 = vst [vmem:[%s215 + $0x48] sm:$0xff] %v385
        %508 = vst [vmem:[%s215 + $0x50] sm:$0xff] %v390
        %509 = vst [vmem:[%s215 + $0x58] sm:$0xff] %v395
        %510 = vst [vmem:[%s215 + $0x60] sm:$0xff] %v400
        %511 = vst [vmem:[%s215 + $0x68] sm:$0xff] %v405
        %512 = vst [vmem:[%s215 + $0x70] sm:$0xff] %v410
        %513 = vst [vmem:[%s215 + $0x78] sm:$0xff] %v415
        %514 = vst [vmem:[%s215 + $0x80] sm:$0xff] %v420
        %515 = vst [vmem:[%s215 + $0x88] sm:$0xff] %v425
        %516 = vst [vmem:[%s215 + $0x90] sm:$0xff] %v430
        %517 = vst [vmem:[%s215 + $0x98] sm:$0xff] %v435
        %518 = vst [vmem:[%s215 + $0xa0] sm:$0xff] %v440
        %519 = vst [vmem:[%s215 + $0xa8] sm:$0xff] %v445
        %520 = vst [vmem:[%s215 + $0xb0] sm:$0xff] %v450
        %521 = vst [vmem:[%s215 + $0xb8] sm:$0xff] %v455
        %522 = vst [vmem:[%s215 + $0xc0] sm:$0xff] %v460
        %523 = vst [vmem:[%s215 + $0xc8] sm:$0xff] %v465
        %524 = vst [vmem:[%s215 + $0xd0] sm:$0xff] %v470
        %525 = vst [vmem:[%s215 + $0xd8] sm:$0xff] %v475
        %526 = vst [vmem:[%s215 + $0xe0] sm:$0xff] %v480
        %527 = vst [vmem:[%s215 + $0xe8] sm:$0xff] %v485
        %528 = vst [vmem:[%s215 + $0xf0] sm:$0xff] %v490
        %529 = vst [vmem:[%s215 + $0xf8] sm:$0xff] %v495
        %s530 = sand.u32 %s97, 1
        %s531 = scalar_lea.sflag [#allocation4], %s530
        %s532 = sand.u32 %s97, 1
        %s533 = smul.addr %s532, 256
        %s534 = scalar_lea.vmem [#allocation8], %s533
        // Predicated region
        $region45: #{tpu_custom_call.1} parent=31 // pred_check
          %p535 = pneg %p107
        $region46: #{tpu_custom_call.1} parent=31 // pred_check_branch
          %537 = sbr.rel (%p535) target = $region48
        $region47: #{tpu_custom_call.1} parent=31 // pred_region
          %s538 = smul.u32 32, %s21
          %s540 = ssub.s32 4096, 4096
          %541 = vsyncadd %s531, %s540
          %s542 = smul.addr %s538, 128
          %s543 = scalar_lea.hbm %s3, %s542
          %s544 = sshll.u32 %s534, 4
          %s545 = int_to_ptr.vmem [resolvable:$true] %s544
          %550 = dma.vmem_to_hbm [thread:$0]  %s545, 4096, %s543, %s531, 128, 128, 8
        $region48: #{tpu_custom_call.1} parent=31 // pred_fallthru
          _
      $region32: #{tpu_custom_call.1} parent=5 // pred_fallthru
        _
      %p551 = scmp.le.s32.totalorder 2, %s16
      // Predicated region
      $region49: #{tpu_custom_call.1} parent=5 // pred_check
        %p552 = pneg %p551
      $region50: #{tpu_custom_call.1} parent=5 // pred_check_branch
        %554 = sbr.rel (%p552) target = $region52
      $region51: #{tpu_custom_call.1} parent=5 // pred_region
        %s555 = ssub.s32 %s16, 2
        // Predicated region
        $region53: #{tpu_custom_call.1} parent=51 // pred_check
          %p556 = pneg %p113
        $region54: #{tpu_custom_call.1} parent=51 // pred_check_branch
          %558 = sbr.rel (%p556) target = $region56
        $region55: #{tpu_custom_call.1} parent=51 // pred_region
          %s559 = sand.u32 %s98, 1
          %s560 = scalar_lea.sflag [#allocation4], %s559
          %s561 = sand.u32 %s98, 1
          %s562 = smul.addr %s561, 256
          %s563 = scalar_lea.vmem [#allocation8], %s562
          %564 = dma.done %s560, 4096
        $region56: #{tpu_custom_call.1} parent=51 // pred_fallthru
          _
      $region52: #{tpu_custom_call.1} parent=5 // pred_fallthru
        _
    $region6: #{tpu_custom_call.1} parent=1 // loop_footer
      %s20 = sadd.s32 1, %s16
    $region7: #{tpu_custom_call.1} parent=1 // loop_footer_branch
      %15 = sbr.rel target = $region3
    $region8: #{tpu_custom_call.1} parent=1 // loop_exit
      _
    %565 = vsyncpa [#allocation3], 1
    %s566 = scalar_lea.sflag [#allocation3], 1
    %567 = vsyncpa %s566, 1
    %568 = vsyncpa [#allocation6], 1
    %569 = vsyncpa [#allocation4], 1
    %s570 = scalar_lea.sflag [#allocation4], 1
    %571 = vsyncpa %s570, 1

</llo_original>
